<compile_context>
chip_gen: v6e
topology: v6e:2x2x1
jax: 0.10.0
libtpu: 0.0.40
codegen_flags: <defaults>
</compile_context>

<pallas_src>
import jax
import jax.numpy as jnp
import numpy as np
from jax.experimental import pallas as pl
from jax.experimental.pallas import tpu as pltpu


def _copy_kernel(w_ref, o_ref):
    # forward() returns the learnable image parameter verbatim.
    o_ref[...] = w_ref[...]


_LANES = 128
# 2048 rows x 128 lanes x 4 B = 1 MiB per tile buffer -> ~4 MiB with
# double-buffered in+out blocks: comfortably under v5e's 16 MiB scoped VMEM
# default and v7x's 32 MiB scoped / 64 MiB physical VMEM.
_MAX_TILE_ROWS = 2048


def _pick_tile_rows(rows: int) -> int:
    """Largest legal tile (<= _MAX_TILE_ROWS) along the row axis."""
    if rows <= _MAX_TILE_ROWS:
        return rows  # full extent -> always satisfies the (8,128)-or-full rule
    # Need a multiple-of-8 divisor of `rows` so every block is full and aligned.
    for t in range(_MAX_TILE_ROWS, 7, -1):
        if rows % t == 0 and t % 8 == 0:
            return t
    return rows  # rare fallback: no friendly divisor -> one big block


def synthesized_image_forward(weight: jax.Array) -> jax.Array:
    """Pallas equivalent of SynthesizedImage.forward(): return the parameter.

    The readout is an identity copy done on a lane-dense (rows, 128) view of
    the parameter, with the output aliased to the input buffer. Large images
    are tiled over a 1-D grid so the copy is pipelined; tiny images (like the
    demo tensor) use a single block since launch overhead dominates anyway.
    """
    orig_shape = weight.shape
    total = weight.size

    if total % _LANES == 0:
        rows = total // _LANES
        x2d = weight.reshape(rows, _LANES)  # free layout plumbing in the wrapper
        tile_rows = _pick_tile_rows(rows)
        grid = (rows // tile_rows,)
        spec = pl.BlockSpec((tile_rows, _LANES), lambda i: (i, 0))
        compiler_params = (
            pltpu.CompilerParams(dimension_semantics=("parallel",))
            if grid[0] > 1
            else None
        )
        out2d = pl.pallas_call(
            _copy_kernel,
            out_shape=jax.ShapeDtypeStruct((rows, _LANES), weight.dtype),
            grid=grid,
            in_specs=[spec],
            out_specs=spec,
            input_output_aliases={0: 0},  # reuse the parameter buffer (donated)
            compiler_params=compiler_params,
        )(x2d)
        return out2d.reshape(orig_shape)

    # Fallback: element count not a multiple of 128 -> single full-extent block
    # (trailing block dims equal the full array dims, satisfying the (8,128)
    # rule). TODO(synk): pad-to-128 tiled path for large non-128-divisible
    # tensors; not needed for typical image shapes.
    return pl.pallas_call(
        _copy_kernel,
        out_shape=jax.ShapeDtypeStruct(orig_shape, weight.dtype),
        input_output_aliases={0: 0},
    )(weight)


if __name__ == "__main__":
    # Deterministic "content tensor" used to initialize the parameter
    # (mirrors nn.Parameter(data=content_tensor) in __init__).
    key = jax.random.PRNGKey(0)
    content_tensor = jax.random.uniform(
        key, shape=(2, 4, 16, 16), dtype=jnp.float32
    )

    # Host copy of the expected value BEFORE the call: input_output_aliases
    # donates the (reshaped) parameter buffer, so don't rely on the device
    # array being live afterwards.
    expected = np.asarray(content_tensor)

    out = synthesized_image_forward(content_tensor)
    out = jax.block_until_ready(out)

    # forward() must return the parameter exactly.
    assert out.shape == expected.shape
    assert out.dtype == expected.dtype
    assert np.array_equal(np.asarray(out), expected)

    print("KERNEL_OK")
</pallas_src>

<mosaic_0001>
module attributes {stable_mosaic.version = 11 : i64} {
  func.func @_copy_kernel(%arg0: i32, %arg1: memref<16x128xf32, #tpu.memory_space<vmem>>, %arg2: memref<16x128xf32, #tpu.memory_space<vmem>>) attributes {dimension_semantics = [#tpu.dimension_semantics<arbitrary>], iteration_bounds = array<i64: 1>, scalar_prefetch = 0 : i64, scratch_operands = 0 : i64, tpu.core_type = #tpu.core_type<tc>, window_params = [{transform_indices = @transform_0, window_bounds = array<i64: 16, 128>}, {transform_indices = @transform_1, window_bounds = array<i64: 16, 128>}]} {
    %c0 = arith.constant 0 : index
    %c0_0 = arith.constant 0 : index
    %0 = vector.load %arg1[%c0, %c0_0] : memref<16x128xf32, #tpu.memory_space<vmem>>, vector<16x128xf32>
    %c0_1 = arith.constant 0 : index
    %c0_2 = arith.constant 0 : index
    %1 = vector.load %arg2[%c0_1, %c0_2] : memref<16x128xf32, #tpu.memory_space<vmem>>, vector<16x128xf32>
    tpu.vector_store %arg2[%c0_1, %c0_2], %0 {strides = array<i32>} : memref<16x128xf32, #tpu.memory_space<vmem>>, vector<16x128xf32>,
    return
  }
  func.func @transform_0(%arg0: i32) -> (i32, i32) {
    %c0_i32 = arith.constant 0 : i32
    %c0_i32_0 = arith.constant 0 : i32
    return %arg0, %c0_i32 : i32, i32
  }
  func.func @transform_1(%arg0: i32) -> (i32, i32) {
    %c0_i32 = arith.constant 0 : i32
    %c0_i32_0 = arith.constant 0 : i32
    return %arg0, %c0_i32 : i32, i32
  }
}

</mosaic_0001>

<llo_original>
// kernel: tpu_custom_call.1
$region0: #{tpu_custom_call.1}
  #allocation0 [shape = 'u32[]', space=smem, size = 0x4, offset = 0x4, fixed_abs, tag = 'smem constant byte address 0x4 - core index']
  #allocation1 [shape = 'u32[144,128]{1,0:T(1,128)}', space=vmem, size = 0x12000, scoped, tag = 'internal scratch']
  %s0 = inlined_call_operand.hbm [shape: f32[16,128], index: 0, kind: input, shape index: {}, may-alias: {0,1}]
  %s1 = inlined_call_operand.hbm [shape: f32[16,128], index: 1, kind: output, shape index: {}, may-alias: {0,1}]
  %s2 = sld [smem:[#allocation0]]
  $region18: #{tpu_custom_call.1} parent=0
    _
  %s4 = ssub.s32 1, %s2
  %s5 = scalar_select 0, %s4, %s2
  $region1: #{tpu_custom_call.1} parent=0
    #allocation2 [shape = 'u8[8192]{0}', space=vmem, size = 0x2000, scoped, tag = 'input window, operand 0, single buffered']
    #allocation3 [shape = 's32[1]{0}', space=sflag, size = 0x4, scoped, tag = 'scoped memory for tpu_custom_call.1']
    #allocation4 [shape = 's32[1]{0}', space=sflag, size = 0x4, scoped, tag = 'scoped memory for tpu_custom_call.1']
    #allocation5 [shape = 'u8[8192]{0}', space=vmem, size = 0x2000, scoped, tag = 'output window, operand 0, single buffered']
    %6 = vsyncpa [#allocation3], 0
    %7 = vsyncpa [#allocation4], 0
    // Predicated region
    $region2: #{tpu_custom_call.1} parent=1 // pred_check
      _
    $region3: #{tpu_custom_call.1} parent=1 // pred_check_branch
      %9 = sbr.rel (0) target = $region5
    $region4: #{tpu_custom_call.1} parent=1 // pred_region
      %s11 = ssub.s32 256, 256
      %12 = vsyncadd [#allocation3], %s11
      %s13 = sshll.u32 [#allocation2], 4
      %s14 = int_to_ptr.vmem [resolvable:$true] %s13
      %19 = dma.hbm_to_vmem [thread:$0]  %s0, 256, %s14, [#allocation3], 128, 128, 8
    $region5: #{tpu_custom_call.1} parent=1 // pred_fallthru
      _
    // Predicated region
    $region6: #{tpu_custom_call.1} parent=1 // pred_check
      _
    $region7: #{tpu_custom_call.1} parent=1 // pred_check_branch
      %21 = sbr.rel (0) target = $region9
    $region8: #{tpu_custom_call.1} parent=1 // pred_region
      %22 = dma.done [#allocation3], 256
    $region9: #{tpu_custom_call.1} parent=1 // pred_fallthru
      _
    %v23 = vld [vmem:[#allocation2] sm:$0xff]
    %v24 = vld [vmem:[#allocation2 + $0x8] sm:$0xff]
    %25 = vst [vmem:[#allocation5] sm:$0xff] %v23
    %26 = vst [vmem:[#allocation5 + $0x8] sm:$0xff] %v24
    // Predicated region
    $region10: #{tpu_custom_call.1} parent=1 // pred_check
      _
    $region11: #{tpu_custom_call.1} parent=1 // pred_check_branch
      %28 = sbr.rel (0) target = $region13
    $region12: #{tpu_custom_call.1} parent=1 // pred_region
      %s30 = ssub.s32 256, 256
      %31 = vsyncadd [#allocation4], %s30
      %s32 = sshll.u32 [#allocation5], 4
      %s33 = int_to_ptr.vmem [resolvable:$true] %s32
      %38 = dma.vmem_to_hbm [thread:$0]  %s33, 256, %s1, [#allocation4], 128, 128, 8
    $region13: #{tpu_custom_call.1} parent=1 // pred_fallthru
      _
    // Predicated region
    $region14: #{tpu_custom_call.1} parent=1 // pred_check
      _
    $region15: #{tpu_custom_call.1} parent=1 // pred_check_branch
      %40 = sbr.rel (0) target = $region17
    $region16: #{tpu_custom_call.1} parent=1 // pred_region
      %41 = dma.done [#allocation4], 256
    $region17: #{tpu_custom_call.1} parent=1 // pred_fallthru
      _
    %42 = vsyncpa [#allocation3], 1
    %43 = vsyncpa [#allocation4], 1

</llo_original>
